<compile_context>
chip_gen: v7x
topology: tpu7x:2x2x1
jax: 0.10.0
libtpu: 0.0.40
codegen_flags: <defaults>
</compile_context>

<pallas_src>
import functools

import jax
import jax.numpy as jnp
from jax.experimental import pallas as pl
from jax.experimental.pallas import tpu as pltpu

LANE = 128       # MXU / lane width the in-VMEM padded operands are rounded to
SUBLANE = 8      # sublane granularity for the batch dim
TILE_CAP = 1024  # max batch rows per grid step (sweepable; VMEM is never the limit)


def _round_up(x, m):
    return (x + m - 1) // m * m


def _pick_tile(n):
    """Batch tile: multiple of 8, capped, and >=2 tiles for large n (v7x megacore)."""
    if n <= SUBLANE:
        return SUBLANE
    half = _round_up(pl.cdiv(n, 2), SUBLANE)
    return max(SUBLANE, min(TILE_CAP, half))


# ---------------------------------------------------------------------------
# Fused kernel: encoder MLP -> decoder MLP, conditioning via merged weights.
# ---------------------------------------------------------------------------
def _fused_cond_ae_kernel(xu_ref,
                          ew1_ref, eb1_ref, ew2_ref, eb2_ref,
                          dw1_ref, dw1u_ref, db1_ref, dw2_ref, db2_ref,
                          out_ref, lat_ref,
                          xpad_ref, *, d_x, d_latent):
    d_in = xu_ref.shape[-1]
    # Zero-pad the packed [x | u] tile to the full lane width inside VMEM.
    # The HBM stream is only d_x+d_u lanes wide; the pad never touches HBM.
    xpad_ref[...] = jnp.zeros_like(xpad_ref)
    xpad_ref[:, :d_in] = xu_ref[...]
    xu = xpad_ref[...]

    # encoder: cat(x, u) @ W1 is a single MXU pass on the packed input.
    h = jnp.dot(xu, ew1_ref[...], preferred_element_type=jnp.float32) + eb1_ref[...]
    h = jnp.maximum(h, 0.0)                                   # ReLU on the VPU
    lat = jnp.dot(h, ew2_ref[...], preferred_element_type=jnp.float32) + eb2_ref[...]

    # decoder: cat(latent, u) @ W1.
    # lat lanes >= d_latent are exactly zero (zero-padded enc_w2/enc_b2 columns), so
    # dot(lat, dec_w1_merged) picks up only the latent rows; the u contribution comes
    # from the packed input via dw1u (u-rows re-based to lane offset d_x).
    h2 = (jnp.dot(lat, dw1_ref[...], preferred_element_type=jnp.float32)
          + jnp.dot(xu, dw1u_ref[...], preferred_element_type=jnp.float32)
          + db1_ref[...])
    h2 = jnp.maximum(h2, 0.0)
    out = jnp.dot(h2, dw2_ref[...], preferred_element_type=jnp.float32) + db2_ref[...]

    # Write back only the logical lanes (minimal HBM writeback).
    lat_ref[...] = lat[:, :d_latent].astype(lat_ref.dtype)
    out_ref[...] = out[:, :d_x].astype(out_ref.dtype)


# Single conditioned 2-layer MLP (fallback for encoder-only / decoder-only paths).
def _cond_mlp_kernel(xu_ref, w1_ref, b1_ref, w2_ref, b2_ref, o_ref, xpad_ref, *, d_out):
    d_in = xu_ref.shape[-1]
    xpad_ref[...] = jnp.zeros_like(xpad_ref)
    xpad_ref[:, :d_in] = xu_ref[...]
    h = jnp.dot(xpad_ref[...], w1_ref[...], preferred_element_type=jnp.float32) + b1_ref[...]
    h = jnp.maximum(h, 0.0)
    o = jnp.dot(h, w2_ref[...], preferred_element_type=jnp.float32) + b2_ref[...]
    o_ref[...] = o[:, :d_out].astype(o_ref.dtype)


# ---------------------------------------------------------------------------
# Wrappers (packing, tiling, pallas_call)
# ---------------------------------------------------------------------------
def _fused_forward(x, u, pp, d_x, d_latent):
    xu = jnp.concatenate((x.astype(jnp.float32), u.astype(jnp.float32)), axis=1)
    n, d_in = xu.shape
    pad = pp["enc_w1"].shape[0]
    tile_n = _pick_tile(n)
    grid = (pl.cdiv(n, tile_n),)

    row = lambda d: pl.BlockSpec((tile_n, d), lambda i: (i, 0))
    res = lambda a: pl.BlockSpec(a.shape, lambda i: (0, 0))   # VMEM-resident across grid

    weights = (pp["enc_w1"], pp["enc_b1"], pp["enc_w2"], pp["enc_b2"],
               pp["dec_w1"], pp["dec_w1u"], pp["dec_b1"], pp["dec_w2"], pp["dec_b2"])

    out, lat = pl.pallas_call(
        functools.partial(_fused_cond_ae_kernel, d_x=d_x, d_latent=d_latent),
        out_shape=(jax.ShapeDtypeStruct((n, d_x), jnp.float32),
                   jax.ShapeDtypeStruct((n, d_latent), jnp.float32)),
        grid=grid,
        in_specs=[row(d_in)] + [res(w) for w in weights],
        out_specs=(row(d_x), row(d_latent)),
        scratch_shapes=[pltpu.VMEM((tile_n, pad), jnp.float32)],
        compiler_params=pltpu.CompilerParams(dimension_semantics=("parallel",)),
    )(xu, *weights)
    return out, lat


def _cond_mlp_forward(a, u, w1, b1, w2, b2, d_out):
    xu = jnp.concatenate((a.astype(jnp.float32), u.astype(jnp.float32)), axis=1)
    n, d_in = xu.shape
    pad = w1.shape[0]
    tile_n = _pick_tile(n)
    grid = (pl.cdiv(n, tile_n),)

    row = lambda d: pl.BlockSpec((tile_n, d), lambda i: (i, 0))
    res = lambda arr: pl.BlockSpec(arr.shape, lambda i: (0, 0))

    return pl.pallas_call(
        functools.partial(_cond_mlp_kernel, d_out=d_out),
        out_shape=jax.ShapeDtypeStruct((n, d_out), jnp.float32),
        grid=grid,
        in_specs=[row(d_in), res(w1), res(b1), res(w2), res(b2)],
        out_specs=row(d_out),
        scratch_shapes=[pltpu.VMEM((tile_n, pad), jnp.float32)],
        compiler_params=pltpu.CompilerParams(dimension_semantics=("parallel",)),
    )(xu, w1, b1, w2, b2)


# ---------------------------------------------------------------------------
# ConditioningAutoencoder forward (mirrors the PyTorch module semantics)
# ---------------------------------------------------------------------------
def conditioning_autoencoder_forward(pp, dims, x, u, t=None,
                                     train_encoder=True, train_decoder=True):
    d_x, d_latent = dims["d_x"], dims["d_latent"]
    if train_encoder and train_decoder:
        out, lat = _fused_forward(x, u, pp, d_x, d_latent)
        return out, lat
    latent = None
    output = None
    if train_encoder:
        latent = _cond_mlp_forward(x, u, pp["enc_w1"], pp["enc_b1"],
                                   pp["enc_w2"], pp["enc_b2"], d_latent)
        x = latent
    if train_decoder:
        output = _cond_mlp_forward(x, u, pp["dec_w1"], pp["dec_b1"],
                                   pp["dec_w2"], pp["dec_b2"], d_x)
    return output, latent


# ---------------------------------------------------------------------------
# Deterministic parameter construction (synthetic, no checkpoint loading)
# ---------------------------------------------------------------------------
def make_params(key, d_x, d_u, d_hidden, d_latent):
    ks = jax.random.split(key, 8)
    scale = 0.1
    return {
        "enc_w1": scale * jax.random.normal(ks[0], (d_x + d_u, d_hidden), jnp.float32),
        "enc_b1": scale * jax.random.normal(ks[1], (1, d_hidden), jnp.float32),
        "enc_w2": scale * jax.random.normal(ks[2], (d_hidden, d_latent), jnp.float32),
        "enc_b2": scale * jax.random.normal(ks[3], (1, d_latent), jnp.float32),
        "dec_w1": scale * jax.random.normal(ks[4], (d_latent + d_u, d_hidden), jnp.float32),
        "dec_b1": scale * jax.random.normal(ks[5], (1, d_hidden), jnp.float32),
        "dec_w2": scale * jax.random.normal(ks[6], (d_hidden, d_x), jnp.float32),
        "dec_b2": scale * jax.random.normal(ks[7], (1, d_x), jnp.float32),
    }


def _place(n_rows, n_cols, block, row_off=0):
    out = jnp.zeros((n_rows, n_cols), jnp.float32)
    return out.at[row_off:row_off + block.shape[0], :block.shape[1]].set(
        block.astype(jnp.float32))


def pad_params(params, d_x, d_u, d_hidden, d_latent):
    """Merge the concat-eliminating first-layer weights and zero-pad every weight/bias
    to a uniform (P, P) / (1, P) lane width (P = LANE multiple).

    Zero padding is load-bearing for correctness of the fused kernel:
      * enc_w2 / enc_b2 columns >= d_latent are zero -> latent lanes >= d_latent are
        exactly zero, so the merged dec_w1 (u-rows at offset d_latent) never sees
        garbage from padded latent lanes.
      * dec_w1u has nonzero rows only at [d_x, d_x+d_u), so the x lanes of the packed
        input contribute nothing to the decoder's conditioning term.
    """
    P = _round_up(max(d_x + d_u, d_latent + d_u, d_hidden), LANE)
    assert d_x <= P and d_latent <= P and d_hidden <= P
    enc_w1 = params["enc_w1"]   # (d_x + d_u, d_hidden): x rows then u rows
    dec_w1 = params["dec_w1"]   # (d_latent + d_u, d_hidden): latent rows then u rows
    return {
        "enc_w1": _place(P, P, enc_w1),
        "enc_b1": _place(1, P, params["enc_b1"]),
        "enc_w2": _place(P, P, params["enc_w2"]),
        "enc_b2": _place(1, P, params["enc_b2"]),
        # merged decoder W1 (latent rows at 0, u rows at d_latent): used for the latent
        # term in the fused kernel and for the decoder-only fallback path.
        "dec_w1": _place(P, P, dec_w1),
        # decoder u-rows re-based to row offset d_x so the packed [x|u] input drives
        # the decoder's conditioning term directly (fused kernel only).
        "dec_w1u": _place(P, P, dec_w1[d_latent:], row_off=d_x),
        "dec_b1": _place(1, P, params["dec_b1"]),
        "dec_w2": _place(P, P, params["dec_w2"]),
        "dec_b2": _place(1, P, params["dec_b2"]),
    }


if __name__ == "__main__":
    # Small shapes consistent with the forward: x (N, d_x), u (N, d_u)
    N, D_X, D_U, D_HID, D_LAT = 8, 16, 8, 32, 16

    key = jax.random.PRNGKey(0)
    k_x, k_u, k_p = jax.random.split(key, 3)

    x = jax.random.normal(k_x, (N, D_X), jnp.float32)
    # conditioning vector (e.g. binary tags) — u.float() in torch is mirrored by the
    # astype(float32) cast done while packing inside the wrapper.
    u = (jax.random.uniform(k_u, (N, D_U)) > 0.5).astype(jnp.float32)

    params = make_params(k_p, D_X, D_U, D_HID, D_LAT)
    pp = pad_params(params, D_X, D_U, D_HID, D_LAT)
    dims = {"d_x": D_X, "d_latent": D_LAT}

    fwd = jax.jit(functools.partial(conditioning_autoencoder_forward, pp, dims))
    output, latent = fwd(x, u)
    jax.block_until_ready((output, latent))
    assert output.shape == (N, D_X) and latent.shape == (N, D_LAT)

    # Pure-JAX reference (original unpadded params).
    def ref_mlp(a, w1, b1, w2, b2):
        h = jnp.maximum(a @ w1 + b1, 0.0)
        return h @ w2 + b2

    lat_r = ref_mlp(jnp.concatenate((x, u), 1),
                    params["enc_w1"], params["enc_b1"],
                    params["enc_w2"], params["enc_b2"])
    out_r = ref_mlp(jnp.concatenate((lat_r, u), 1),
                    params["dec_w1"], params["dec_b1"],
                    params["dec_w2"], params["dec_b2"])
    assert jnp.allclose(latent, lat_r, atol=2e-5), "fused latent mismatch"
    assert jnp.allclose(output, out_r, atol=2e-5), "fused output mismatch"

    # Fallback (encoder-only / decoder-only) paths.
    none_out, lat_only = conditioning_autoencoder_forward(pp, dims, x, u,
                                                          train_decoder=False)
    out_only, none_lat = conditioning_autoencoder_forward(pp, dims, lat_r, u,
                                                          train_encoder=False)
    assert none_out is None and none_lat is None
    assert jnp.allclose(lat_only, lat_r, atol=2e-5)
    assert jnp.allclose(out_only, out_r, atol=2e-5)

    # Multi-tile grid with a partial last tile (exercises masked batch edges + megacore).
    N2 = 300
    k_x2, k_u2 = jax.random.split(jax.random.PRNGKey(1))
    x2 = jax.random.normal(k_x2, (N2, D_X), jnp.float32)
    u2 = (jax.random.uniform(k_u2, (N2, D_U)) > 0.5).astype(jnp.float32)
    out2, lat2 = fwd(x2, u2)
    jax.block_until_ready((out2, lat2))
    lat2_r = ref_mlp(jnp.concatenate((x2, u2), 1),
                     params["enc_w1"], params["enc_b1"],
                     params["enc_w2"], params["enc_b2"])
    out2_r = ref_mlp(jnp.concatenate((lat2_r, u2), 1),
                     params["dec_w1"], params["dec_b1"],
                     params["dec_w2"], params["dec_b2"])
    assert jnp.allclose(lat2, lat2_r, atol=1e-4)
    assert jnp.allclose(out2, out2_r, atol=1e-4)

    print("KERNEL_OK")
</pallas_src>

<mosaic_0001>
module attributes {stable_mosaic.version = 11 : i64} {
  func.func @_fused_cond_ae_kernel(%arg0: i32, %arg1: memref<8x24xf32, #tpu.memory_space<vmem>>, %arg2: memref<128x128xf32, #tpu.memory_space<vmem>>, %arg3: memref<1x128xf32, #tpu.memory_space<vmem>>, %arg4: memref<128x128xf32, #tpu.memory_space<vmem>>, %arg5: memref<1x128xf32, #tpu.memory_space<vmem>>, %arg6: memref<128x128xf32, #tpu.memory_space<vmem>>, %arg7: memref<128x128xf32, #tpu.memory_space<vmem>>, %arg8: memref<1x128xf32, #tpu.memory_space<vmem>>, %arg9: memref<128x128xf32, #tpu.memory_space<vmem>>, %arg10: memref<1x128xf32, #tpu.memory_space<vmem>>, %arg11: memref<8x16xf32, #tpu.memory_space<vmem>>, %arg12: memref<8x16xf32, #tpu.memory_space<vmem>>, %arg13: memref<8x128xf32, #tpu.memory_space<vmem>>) attributes {dimension_semantics = [#tpu.dimension_semantics<parallel>], iteration_bounds = array<i64: 1>, scalar_prefetch = 0 : i64, scratch_operands = 1 : i64, tpu.core_type = #tpu.core_type<tc>, window_params = [{transform_indices = @transform_0, window_bounds = array<i64: 8, 24>}, {pipeline_mode = #tpu.pipeline_mode<synchronous>, transform_indices = @transform_1, window_bounds = array<i64: 128, 128>}, {pipeline_mode = #tpu.pipeline_mode<synchronous>, transform_indices = @transform_2, window_bounds = array<i64: 1, 128>}, {pipeline_mode = #tpu.pipeline_mode<synchronous>, transform_indices = @transform_3, window_bounds = array<i64: 128, 128>}, {pipeline_mode = #tpu.pipeline_mode<synchronous>, transform_indices = @transform_4, window_bounds = array<i64: 1, 128>}, {pipeline_mode = #tpu.pipeline_mode<synchronous>, transform_indices = @transform_5, window_bounds = array<i64: 128, 128>}, {pipeline_mode = #tpu.pipeline_mode<synchronous>, transform_indices = @transform_6, window_bounds = array<i64: 128, 128>}, {pipeline_mode = #tpu.pipeline_mode<synchronous>, transform_indices = @transform_7, window_bounds = array<i64: 1, 128>}, {pipeline_mode = #tpu.pipeline_mode<synchronous>, transform_indices = @transform_8, window_bounds = array<i64: 128, 128>}, {pipeline_mode = #tpu.pipeline_mode<synchronous>, transform_indices = @transform_9, window_bounds = array<i64: 1, 128>}, {transform_indices = @transform_10, window_bounds = array<i64: 8, 16>}, {transform_indices = @transform_11, window_bounds = array<i64: 8, 16>}]} {
    %cst = arith.constant 0.000000e+00 : f32
    %0 = vector.broadcast %cst : f32 to vector<8x128xf32>
    %c0 = arith.constant 0 : index
    %c0_0 = arith.constant 0 : index
    %1 = vector.load %arg13[%c0, %c0_0] : memref<8x128xf32, #tpu.memory_space<vmem>>, vector<8x128xf32>
    tpu.vector_store %arg13[%c0, %c0_0], %0 {strides = array<i32>} : memref<8x128xf32, #tpu.memory_space<vmem>>, vector<8x128xf32>,
    %c0_1 = arith.constant 0 : index
    %c0_2 = arith.constant 0 : index
    %2 = vector.load %arg1[%c0_1, %c0_2] : memref<8x24xf32, #tpu.memory_space<vmem>>, vector<8x24xf32>
    %c0_3 = arith.constant 0 : index
    %c0_4 = arith.constant 0 : index
    %3 = vector.load %arg13[%c0_3, %c0_4] : memref<8x128xf32, #tpu.memory_space<vmem>>, vector<8x24xf32>
    tpu.vector_store %arg13[%c0_3, %c0_4], %2 {strides = array<i32>} : memref<8x128xf32, #tpu.memory_space<vmem>>, vector<8x24xf32>,
    %c0_5 = arith.constant 0 : index
    %c0_6 = arith.constant 0 : index
    %4 = vector.load %arg13[%c0_5, %c0_6] : memref<8x128xf32, #tpu.memory_space<vmem>>, vector<8x128xf32>
    %c0_7 = arith.constant 0 : index
    %c0_8 = arith.constant 0 : index
    %5 = vector.load %arg2[%c0_7, %c0_8] : memref<128x128xf32, #tpu.memory_space<vmem>>, vector<128x128xf32>
    %cst_9 = arith.constant dense<0.000000e+00> : vector<8x128xf32>
    %6 = tpu.matmul %4, %5, %cst_9 {dimension_numbers = #tpu.dot_dimension_numbers<[1], [0], [0], [1], [0, 0, 1, 1], [], []>} : vector<8x128xf32>, vector<128x128xf32>, vector<8x128xf32> -> vector<8x128xf32>
    %c0_10 = arith.constant 0 : index
    %c0_11 = arith.constant 0 : index
    %7 = vector.load %arg3[%c0_10, %c0_11] : memref<1x128xf32, #tpu.memory_space<vmem>>, vector<1x128xf32>
    %8 = vector.broadcast %7 : vector<1x128xf32> to vector<8x128xf32>
    %9 = arith.addf %6, %8 : vector<8x128xf32>
    %cst_12 = arith.constant 0.000000e+00 : f32
    %10 = vector.broadcast %cst_12 : f32 to vector<8x128xf32>
    %11 = arith.maximumf %9, %10 : vector<8x128xf32>
    %c0_13 = arith.constant 0 : index
    %c0_14 = arith.constant 0 : index
    %12 = vector.load %arg4[%c0_13, %c0_14] : memref<128x128xf32, #tpu.memory_space<vmem>>, vector<128x128xf32>
    %cst_15 = arith.constant dense<0.000000e+00> : vector<8x128xf32>
    %13 = tpu.matmul %11, %12, %cst_15 {dimension_numbers = #tpu.dot_dimension_numbers<[1], [0], [0], [1], [0, 0, 1, 1], [], []>} : vector<8x128xf32>, vector<128x128xf32>, vector<8x128xf32> -> vector<8x128xf32>
    %c0_16 = arith.constant 0 : index
    %c0_17 = arith.constant 0 : index
    %14 = vector.load %arg5[%c0_16, %c0_17] : memref<1x128xf32, #tpu.memory_space<vmem>>, vector<1x128xf32>
    %15 = vector.broadcast %14 : vector<1x128xf32> to vector<8x128xf32>
    %16 = arith.addf %13, %15 : vector<8x128xf32>
    %c0_18 = arith.constant 0 : index
    %c0_19 = arith.constant 0 : index
    %17 = vector.load %arg6[%c0_18, %c0_19] : memref<128x128xf32, #tpu.memory_space<vmem>>, vector<128x128xf32>
    %cst_20 = arith.constant dense<0.000000e+00> : vector<8x128xf32>
    %18 = tpu.matmul %16, %17, %cst_20 {dimension_numbers = #tpu.dot_dimension_numbers<[1], [0], [0], [1], [0, 0, 1, 1], [], []>} : vector<8x128xf32>, vector<128x128xf32>, vector<8x128xf32> -> vector<8x128xf32>
    %c0_21 = arith.constant 0 : index
    %c0_22 = arith.constant 0 : index
    %19 = vector.load %arg7[%c0_21, %c0_22] : memref<128x128xf32, #tpu.memory_space<vmem>>, vector<128x128xf32>
    %cst_23 = arith.constant dense<0.000000e+00> : vector<8x128xf32>
    %20 = tpu.matmul %4, %19, %cst_23 {dimension_numbers = #tpu.dot_dimension_numbers<[1], [0], [0], [1], [0, 0, 1, 1], [], []>} : vector<8x128xf32>, vector<128x128xf32>, vector<8x128xf32> -> vector<8x128xf32>
    %21 = arith.addf %18, %20 : vector<8x128xf32>
    %c0_24 = arith.constant 0 : index
    %c0_25 = arith.constant 0 : index
    %22 = vector.load %arg8[%c0_24, %c0_25] : memref<1x128xf32, #tpu.memory_space<vmem>>, vector<1x128xf32>
    %23 = vector.broadcast %22 : vector<1x128xf32> to vector<8x128xf32>
    %24 = arith.addf %21, %23 : vector<8x128xf32>
    %cst_26 = arith.constant 0.000000e+00 : f32
    %25 = vector.broadcast %cst_26 : f32 to vector<8x128xf32>
    %26 = arith.maximumf %24, %25 : vector<8x128xf32>
    %c0_27 = arith.constant 0 : index
    %c0_28 = arith.constant 0 : index
    %27 = vector.load %arg9[%c0_27, %c0_28] : memref<128x128xf32, #tpu.memory_space<vmem>>, vector<128x128xf32>
    %cst_29 = arith.constant dense<0.000000e+00> : vector<8x128xf32>
    %28 = tpu.matmul %26, %27, %cst_29 {dimension_numbers = #tpu.dot_dimension_numbers<[1], [0], [0], [1], [0, 0, 1, 1], [], []>} : vector<8x128xf32>, vector<128x128xf32>, vector<8x128xf32> -> vector<8x128xf32>
    %c0_30 = arith.constant 0 : index
    %c0_31 = arith.constant 0 : index
    %29 = vector.load %arg10[%c0_30, %c0_31] : memref<1x128xf32, #tpu.memory_space<vmem>>, vector<1x128xf32>
    %30 = vector.broadcast %29 : vector<1x128xf32> to vector<8x128xf32>
    %31 = arith.addf %28, %30 : vector<8x128xf32>
    %32 = vector.extract_strided_slice %16 {offsets = [0, 0], sizes = [8, 16], strides = [1, 1]} : vector<8x128xf32> to vector<8x16xf32>
    %c0_32 = arith.constant 0 : index
    %c0_33 = arith.constant 0 : index
    %33 = vector.load %arg12[%c0_32, %c0_33] : memref<8x16xf32, #tpu.memory_space<vmem>>, vector<8x16xf32>
    tpu.vector_store %arg12[%c0_32, %c0_33], %32 {strides = array<i32>} : memref<8x16xf32, #tpu.memory_space<vmem>>, vector<8x16xf32>,
    %34 = vector.extract_strided_slice %31 {offsets = [0, 0], sizes = [8, 16], strides = [1, 1]} : vector<8x128xf32> to vector<8x16xf32>
    %c0_34 = arith.constant 0 : index
    %c0_35 = arith.constant 0 : index
    %35 = vector.load %arg11[%c0_34, %c0_35] : memref<8x16xf32, #tpu.memory_space<vmem>>, vector<8x16xf32>
    tpu.vector_store %arg11[%c0_34, %c0_35], %34 {strides = array<i32>} : memref<8x16xf32, #tpu.memory_space<vmem>>, vector<8x16xf32>,
    return
  }
  func.func @transform_0(%arg0: i32) -> (i32, i32) {
    %c0_i32 = arith.constant 0 : i32
    %c0_i32_0 = arith.constant 0 : i32
    return %arg0, %c0_i32 : i32, i32
  }
  func.func @transform_1(%arg0: i32) -> (i32, i32) {
    %c0_i32 = arith.constant 0 : i32
    %c0_i32_0 = arith.constant 0 : i32
    %c0_i32_1 = arith.constant 0 : i32
    return %c0_i32, %c0_i32_0 : i32, i32
  }
  func.func @transform_2(%arg0: i32) -> (i32, i32) {
    %c0_i32 = arith.constant 0 : i32
    %c0_i32_0 = arith.constant 0 : i32
    %c0_i32_1 = arith.constant 0 : i32
    return %c0_i32, %c0_i32_0 : i32, i32
  }
  func.func @transform_3(%arg0: i32) -> (i32, i32) {
    %c0_i32 = arith.constant 0 : i32
    %c0_i32_0 = arith.constant 0 : i32
    %c0_i32_1 = arith.constant 0 : i32
    return %c0_i32, %c0_i32_0 : i32, i32
  }
  func.func @transform_4(%arg0: i32) -> (i32, i32) {
    %c0_i32 = arith.constant 0 : i32
    %c0_i32_0 = arith.constant 0 : i32
    %c0_i32_1 = arith.constant 0 : i32
    return %c0_i32, %c0_i32_0 : i32, i32
  }
  func.func @transform_5(%arg0: i32) -> (i32, i32) {
    %c0_i32 = arith.constant 0 : i32
    %c0_i32_0 = arith.constant 0 : i32
    %c0_i32_1 = arith.constant 0 : i32
    return %c0_i32, %c0_i32_0 : i32, i32
  }
  func.func @transform_6(%arg0: i32) -> (i32, i32) {
    %c0_i32 = arith.constant 0 : i32
    %c0_i32_0 = arith.constant 0 : i32
    %c0_i32_1 = arith.constant 0 : i32
    return %c0_i32, %c0_i32_0 : i32, i32
  }
  func.func @transform_7(%arg0: i32) -> (i32, i32) {
    %c0_i32 = arith.constant 0 : i32
    %c0_i32_0 = arith.constant 0 : i32
    %c0_i32_1 = arith.constant 0 : i32
    return %c0_i32, %c0_i32_0 : i32, i32
  }
  func.func @transform_8(%arg0: i32) -> (i32, i32) {
    %c0_i32 = arith.constant 0 : i32
    %c0_i32_0 = arith.constant 0 : i32
    %c0_i32_1 = arith.constant 0 : i32
    return %c0_i32, %c0_i32_0 : i32, i32
  }
  func.func @transform_9(%arg0: i32) -> (i32, i32) {
    %c0_i32 = arith.constant 0 : i32
    %c0_i32_0 = arith.constant 0 : i32
    %c0_i32_1 = arith.constant 0 : i32
    return %c0_i32, %c0_i32_0 : i32, i32
  }
  func.func @transform_10(%arg0: i32) -> (i32, i32) {
    %c0_i32 = arith.constant 0 : i32
    %c0_i32_0 = arith.constant 0 : i32
    return %arg0, %c0_i32 : i32, i32
  }
  func.func @transform_11(%arg0: i32) -> (i32, i32) {
    %c0_i32 = arith.constant 0 : i32
    %c0_i32_0 = arith.constant 0 : i32
    return %arg0, %c0_i32 : i32, i32
  }
}

</mosaic_0001>

<llo_original>
// kernel: conditioning_autoencoder_forward.1
$region0: #{conditioning_autoencoder_forward.1}
  #allocation0 [shape = 'u32[]', space=smem, size = 0x4, offset = 0x4, fixed_abs, tag = 'smem constant byte address 0x4 - core index']
  #allocation1 [shape = 'u32[144,128]{1,0:T(1,128)}', space=vmem, size = 0x12000, scoped, tag = 'internal scratch']
  #allocation2 [shape = 'f32[8,128]{1,0:T(8,128)}', space=vmem, size = 0x1000, scoped, tag = 'scratch operand']
  %s0 = inlined_call_operand.vmem [shape: f32[8,24], index: 0, kind: input, shape index: {}]
  %s1 = inlined_call_operand.hbm [shape: f32[128,128], index: 1, kind: input, shape index: {}]
  %s2 = inlined_call_operand.vmem [shape: f32[1,128], index: 2, kind: input, shape index: {}]
  %s3 = inlined_call_operand.hbm [shape: f32[128,128], index: 3, kind: input, shape index: {}]
  %s4 = inlined_call_operand.vmem [shape: f32[1,128], index: 4, kind: input, shape index: {}]
  %s5 = inlined_call_operand.hbm [shape: f32[128,128], index: 5, kind: input, shape index: {}]
  %s6 = inlined_call_operand.hbm [shape: f32[128,128], index: 6, kind: input, shape index: {}]
  %s7 = inlined_call_operand.vmem [shape: f32[1,128], index: 7, kind: input, shape index: {}]
  %s8 = inlined_call_operand.hbm [shape: f32[128,128], index: 8, kind: input, shape index: {}]
  %s9 = inlined_call_operand.vmem [shape: f32[1,128], index: 9, kind: input, shape index: {}]
  %s10 = inlined_call_operand.hbm [shape: f32[8,16], index: 10, kind: output, shape index: {0}]
  %s11 = inlined_call_operand.hbm [shape: f32[8,16], index: 11, kind: output, shape index: {1}]
  %12 = xla_tuple %s10, %s11
  %s13 = sld [smem:[#allocation0]]
  $region78: #{conditioning_autoencoder_forward.1} parent=0
    _
  %s15 = ssub.s32 1, %s13
  %s16 = scalar_select 0, %s15, %s13
  $region1: #{conditioning_autoencoder_forward.1} parent=0
    #allocation3 [shape = 'u8[65536]{0}', space=vmem, size = 0x10000, scoped, tag = 'input window, operand 1, single buffered']
    #allocation4 [shape = 's32[1]{0}', space=sflag, size = 0x4, scoped, tag = 'scoped memory for conditioning_autoencoder_forward.1']
    #allocation5 [shape = 's32[1]{0}', space=sflag, size = 0x4, scoped, tag = 'scoped memory for conditioning_autoencoder_forward.1']
    #allocation6 [shape = 'u8[65536]{0}', space=vmem, size = 0x10000, scoped, tag = 'input window, operand 3, single buffered']
    #allocation7 [shape = 's32[1]{0}', space=sflag, size = 0x4, scoped, tag = 'scoped memory for conditioning_autoencoder_forward.1']
    #allocation8 [shape = 'u8[65536]{0}', space=vmem, size = 0x10000, scoped, tag = 'input window, operand 5, single buffered']
    #allocation9 [shape = 'u8[65536]{0}', space=vmem, size = 0x10000, scoped, tag = 'input window, operand 6, single buffered']
    #allocation10 [shape = 's32[1]{0}', space=sflag, size = 0x4, scoped, tag = 'scoped memory for conditioning_autoencoder_forward.1']
    #allocation11 [shape = 'u8[65536]{0}', space=vmem, size = 0x10000, scoped, tag = 'input window, operand 8, single buffered']
    #allocation12 [shape = 'u8[4096]{0}', space=vmem, size = 0x1000, scoped, tag = 'output window, operand 0, single buffered']
    #allocation13 [shape = 'u8[4096]{0}', space=vmem, size = 0x1000, scoped, tag = 'output window, operand 1, single buffered']
    #allocation14 [shape = 's32[1]{0}', space=sflag, size = 0x4, scoped, tag = 'scoped memory for conditioning_autoencoder_forward.1']
    %17 = vsyncpa [#allocation4], 0
    %18 = vsyncpa [#allocation7], 0
    %19 = vsyncpa [#allocation10], 0
    %20 = vsyncpa [#allocation5], 0
    %21 = vsyncpa [#allocation14], 0
    // Predicated region
    $region2: #{conditioning_autoencoder_forward.1} parent=1 // pred_check
      _
    $region3: #{conditioning_autoencoder_forward.1} parent=1 // pred_check_branch
      %23 = sbr.rel (0) target = $region5
    $region4: #{conditioning_autoencoder_forward.1} parent=1 // pred_region
      _
    $region5: #{conditioning_autoencoder_forward.1} parent=1 // pred_fallthru
      _
    // Predicated region
    $region6: #{conditioning_autoencoder_forward.1} parent=1 // pred_check
      _
    $region7: #{conditioning_autoencoder_forward.1} parent=1 // pred_check_branch
      %25 = sbr.rel (0) target = $region9
    $region8: #{conditioning_autoencoder_forward.1} parent=1 // pred_region
      %s27 = ssub.s32 2048, 2048
      %28 = vsyncadd [#allocation4], %s27
      %s29 = sshll.u32 [#allocation3], 4
      %s30 = int_to_ptr.vmem [resolvable:$true] %s29
      %35 = dma.hbm_to_vmem [thread:$0]  %s1, 2048, %s30, [#allocation4], 128, 128, 8
    $region9: #{conditioning_autoencoder_forward.1} parent=1 // pred_fallthru
      _
    // Predicated region
    $region10: #{conditioning_autoencoder_forward.1} parent=1 // pred_check
      _
    $region11: #{conditioning_autoencoder_forward.1} parent=1 // pred_check_branch
      %37 = sbr.rel (0) target = $region13
    $region12: #{conditioning_autoencoder_forward.1} parent=1 // pred_region
      _
    $region13: #{conditioning_autoencoder_forward.1} parent=1 // pred_fallthru
      _
    // Predicated region
    $region14: #{conditioning_autoencoder_forward.1} parent=1 // pred_check
      _
    $region15: #{conditioning_autoencoder_forward.1} parent=1 // pred_check_branch
      %39 = sbr.rel (0) target = $region17
    $region16: #{conditioning_autoencoder_forward.1} parent=1 // pred_region
      %s41 = ssub.s32 2048, 2048
      %42 = vsyncadd [#allocation7], %s41
      %s43 = sshll.u32 [#allocation6], 4
      %s44 = int_to_ptr.vmem [resolvable:$true] %s43
      %49 = dma.hbm_to_vmem [thread:$0]  %s3, 2048, %s44, [#allocation7], 128, 128, 8
    $region17: #{conditioning_autoencoder_forward.1} parent=1 // pred_fallthru
      _
    // Predicated region
    $region18: #{conditioning_autoencoder_forward.1} parent=1 // pred_check
      _
    $region19: #{conditioning_autoencoder_forward.1} parent=1 // pred_check_branch
      %51 = sbr.rel (0) target = $region21
    $region20: #{conditioning_autoencoder_forward.1} parent=1 // pred_region
      _
    $region21: #{conditioning_autoencoder_forward.1} parent=1 // pred_fallthru
      _
    // Predicated region
    $region22: #{conditioning_autoencoder_forward.1} parent=1 // pred_check
      _
    $region23: #{conditioning_autoencoder_forward.1} parent=1 // pred_check_branch
      %53 = sbr.rel (0) target = $region25
    $region24: #{conditioning_autoencoder_forward.1} parent=1 // pred_region
      %s55 = ssub.s32 2048, 2048
      %56 = vsyncadd [#allocation7], %s55
      %s57 = sshll.u32 [#allocation8], 4
      %s58 = int_to_ptr.vmem [resolvable:$true] %s57
      %63 = dma.hbm_to_vmem [thread:$0]  %s5, 2048, %s58, [#allocation7], 128, 128, 8
    $region25: #{conditioning_autoencoder_forward.1} parent=1 // pred_fallthru
      _
    // Predicated region
    $region26: #{conditioning_autoencoder_forward.1} parent=1 // pred_check
      _
    $region27: #{conditioning_autoencoder_forward.1} parent=1 // pred_check_branch
      %65 = sbr.rel (0) target = $region29
    $region28: #{conditioning_autoencoder_forward.1} parent=1 // pred_region
      %s67 = ssub.s32 2048, 2048
      %68 = vsyncadd [#allocation10], %s67
      %s69 = sshll.u32 [#allocation9], 4
      %s70 = int_to_ptr.vmem [resolvable:$true] %s69
      %75 = dma.hbm_to_vmem [thread:$0]  %s6, 2048, %s70, [#allocation10], 128, 128, 8
    $region29: #{conditioning_autoencoder_forward.1} parent=1 // pred_fallthru
      _
    // Predicated region
    $region30: #{conditioning_autoencoder_forward.1} parent=1 // pred_check
      _
    $region31: #{conditioning_autoencoder_forward.1} parent=1 // pred_check_branch
      %77 = sbr.rel (0) target = $region33
    $region32: #{conditioning_autoencoder_forward.1} parent=1 // pred_region
      _
    $region33: #{conditioning_autoencoder_forward.1} parent=1 // pred_fallthru
      _
    // Predicated region
    $region34: #{conditioning_autoencoder_forward.1} parent=1 // pred_check
      _
    $region35: #{conditioning_autoencoder_forward.1} parent=1 // pred_check_branch
      %79 = sbr.rel (0) target = $region37
    $region36: #{conditioning_autoencoder_forward.1} parent=1 // pred_region
      %s81 = ssub.s32 2048, 2048
      %82 = vsyncadd [#allocation10], %s81
      %s83 = sshll.u32 [#allocation11], 4
      %s84 = int_to_ptr.vmem [resolvable:$true] %s83
      %89 = dma.hbm_to_vmem [thread:$0]  %s8, 2048, %s84, [#allocation10], 128, 128, 8
    $region37: #{conditioning_autoencoder_forward.1} parent=1 // pred_fallthru
      _
    // Predicated region
    $region38: #{conditioning_autoencoder_forward.1} parent=1 // pred_check
      _
    $region39: #{conditioning_autoencoder_forward.1} parent=1 // pred_check_branch
      %91 = sbr.rel (0) target = $region41
    $region40: #{conditioning_autoencoder_forward.1} parent=1 // pred_region
      _
    $region41: #{conditioning_autoencoder_forward.1} parent=1 // pred_fallthru
      _
    // Predicated region
    $region42: #{conditioning_autoencoder_forward.1} parent=1 // pred_check
      _
    $region43: #{conditioning_autoencoder_forward.1} parent=1 // pred_check_branch
      %93 = sbr.rel (0) target = $region45
    $region44: #{conditioning_autoencoder_forward.1} parent=1 // pred_region
      %94 = dma.done [#allocation4], 2048
    $region45: #{conditioning_autoencoder_forward.1} parent=1 // pred_fallthru
      _
    // Predicated region
    $region46: #{conditioning_autoencoder_forward.1} parent=1 // pred_check
      _
    $region47: #{conditioning_autoencoder_forward.1} parent=1 // pred_check_branch
      %96 = sbr.rel (0) target = $region49
    $region48: #{conditioning_autoencoder_forward.1} parent=1 // pred_region
      %97 = dma.done [#allocation7], 2048
    $region49: #{conditioning_autoencoder_forward.1} parent=1 // pred_fallthru
      _
    // Predicated region
    $region50: #{conditioning_autoencoder_forward.1} parent=1 // pred_check
      _
    $region51: #{conditioning_autoencoder_forward.1} parent=1 // pred_check_branch
      %99 = sbr.rel (0) target = $region53
    $region52: #{conditioning_autoencoder_forward.1} parent=1 // pred_region
      %100 = dma.done [#allocation7], 2048
    $region53: #{conditioning_autoencoder_forward.1} parent=1 // pred_fallthru
      _
    // Predicated region
    $region54: #{conditioning_autoencoder_forward.1} parent=1 // pred_check
      _
    $region55: #{conditioning_autoencoder_forward.1} parent=1 // pred_check_branch
      %102 = sbr.rel (0) target = $region57
    $region56: #{conditioning_autoencoder_forward.1} parent=1 // pred_region
      %103 = dma.done [#allocation10], 2048
    $region57: #{conditioning_autoencoder_forward.1} parent=1 // pred_fallthru
      _
    // Predicated region
    $region58: #{conditioning_autoencoder_forward.1} parent=1 // pred_check
      _
    $region59: #{conditioning_autoencoder_forward.1} parent=1 // pred_check_branch
      %105 = sbr.rel (0) target = $region61
    $region60: #{conditioning_autoencoder_forward.1} parent=1 // pred_region
      %106 = dma.done [#allocation10], 2048
    $region61: #{conditioning_autoencoder_forward.1} parent=1 // pred_fallthru
      _
    %107 = vst [vmem:[#allocation2] sm:$0xff] 0.0
    %v108 = vld [vmem:[%s0] sm:$0xff]
    %vm109 = vcmask 195584
    %110 = vst.msk [vmem:[#allocation2] sm:$0xff] %vm109, %v108
    %v111 = vld [vmem:[#allocation2] sm:$0xff]
    %v112 = vld [vmem:[#allocation3] sm:$0xff]
    %v113 = vld [vmem:[#allocation3 + $0x8] sm:$0xff]
    %v114 = vld [vmem:[#allocation3 + $0x10] sm:$0xff]
    %v115 = vld [vmem:[#allocation3 + $0x18] sm:$0xff]
    %v116 = vld [vmem:[#allocation3 + $0x20] sm:$0xff]
    %v117 = vld [vmem:[#allocation3 + $0x28] sm:$0xff]
    %v118 = vld [vmem:[#allocation3 + $0x30] sm:$0xff]
    %v119 = vld [vmem:[#allocation3 + $0x38] sm:$0xff]
    %v120 = vld [vmem:[#allocation3 + $0x40] sm:$0xff]
    %v121 = vld [vmem:[#allocation3 + $0x48] sm:$0xff]
    %v122 = vld [vmem:[#allocation3 + $0x50] sm:$0xff]
    %v123 = vld [vmem:[#allocation3 + $0x58] sm:$0xff]
    %v124 = vld [vmem:[#allocation3 + $0x60] sm:$0xff]
    %v125 = vld [vmem:[#allocation3 + $0x68] sm:$0xff]
    %v126 = vld [vmem:[#allocation3 + $0x70] sm:$0xff]
    %v127 = vld [vmem:[#allocation3 + $0x78] sm:$0xff]
    %v128 = vld [vmem:[%s2] sm:$0x1]
    %v130 = vlaneseq
    %v131 = vshrl.u32 %v130, 7
    %v132 = vsub.s32 0, %v131
    %v133 = vrot.slane %v128, %v132
    %135 = vmatprep.subr.mxu0 0.0
    %136 = vmatpush1.msra.mxu0 %v112
    %137 = vmatprep.subr.mxu0 0.0
    %138 = vmatpush1.msra.mxu0 %v113
    %139 = vmatprep.subr.mxu0 0.0
    %140 = vmatpush1.msra.mxu0 %v114
    %141 = vmatprep.subr.mxu0 0.0
    %142 = vmatpush1.msra.mxu0 %v115
    %143 = vmatprep.subr.mxu0 0.0
    %144 = vmatpush1.msra.mxu0 %v116
    %145 = vmatprep.subr.mxu0 0.0
    %146 = vmatpush1.msra.mxu0 %v117
    %147 = vmatprep.subr.mxu0 0.0
    %148 = vmatpush1.msra.mxu0 %v118
    %149 = vmatprep.subr.mxu0 0.0
    %150 = vmatpush1.msra.mxu0 %v119
    %151 = vmatprep.subr.mxu0 0.0
    %152 = vmatpush1.msra.mxu0 %v120
    %153 = vmatprep.subr.mxu0 0.0
    %154 = vmatpush1.msra.mxu0 %v121
    %155 = vmatprep.subr.mxu0 0.0
    %156 = vmatpush1.msra.mxu0 %v122
    %157 = vmatprep.subr.mxu0 0.0
    %158 = vmatpush1.msra.mxu0 %v123
    %159 = vmatprep.subr.mxu0 0.0
    %160 = vmatpush1.msra.mxu0 %v124
    %161 = vmatprep.subr.mxu0 0.0
    %162 = vmatpush1.msra.mxu0 %v125
    %163 = vmatprep.subr.mxu0 0.0
    %164 = vmatpush1.msra.mxu0 %v126
    %165 = vmatprep.subr.mxu0 0.0
    %166 = vmatpush1.msra.mxu0 %v127
    %167 = vmatprep.subr.mxu0 0.0
    %168 = vmatpush1.msra.mxu0 0.0
    %169 = vmatprep.subr.mxu0 0.0
    %170 = vmatpush1.msra.mxu0 0.0
    %171 = vmatprep.subr.mxu0 0.0
    %172 = vmatpush1.msra.mxu0 0.0
    %173 = vmatprep.subr.mxu0 0.0
    %174 = vmatpush1.msra.mxu0 0.0
    %175 = vmatprep.subr.mxu0 0.0
    %176 = vmatpush1.msra.mxu0 0.0
    %177 = vmatprep.subr.mxu0 0.0
    %178 = vmatpush1.msra.mxu0 0.0
    %179 = vmatprep.subr.mxu0 0.0
    %180 = vmatpush1.msra.mxu0 0.0
    %181 = vmatprep.subr.mxu0 0.0
    %182 = vmatpush1.msra.mxu0 0.0
    %183 = vmatprep.subr.mxu0 0.0
    %184 = vmatpush1.msra.mxu0 0.0
    %185 = vmatprep.subr.mxu0 0.0
    %186 = vmatpush1.msra.mxu0 0.0
    %187 = vmatprep.subr.mxu0 0.0
    %188 = vmatpush1.msra.mxu0 0.0
    %189 = vmatprep.subr.mxu0 0.0
    %190 = vmatpush1.msra.mxu0 0.0
    %191 = vmatprep.subr.mxu0 0.0
    %192 = vmatpush1.msra.mxu0 0.0
    %193 = vmatprep.subr.mxu0 0.0
    %194 = vmatpush1.msra.mxu0 0.0
    %195 = vmatprep.subr.mxu0 0.0
    %196 = vmatpush1.msra.mxu0 0.0
    %197 = vmatprep.subr.mxu0 0.0
    %198 = vmatpush1.msra.mxu0 0.0
    %199 = vmatprep.mubr.f32.mxu0 0.0
    %200 = vmatmul.mubr.f32.gmra.mrb[0].mxu0 %v111
    %v201 = vpop.f32.mrb[0].mxu0
    %v202 = vadd.f32 %v133, %v201
    %v203 = vpop.f32.mrb[0].mxu0
    %204 = vdwg.mxu0
    %v205 = vmax.f32 %v202, 0.0
    %v206 = vld [vmem:[#allocation6] sm:$0xff]
    %v207 = vld [vmem:[#allocation6 + $0x8] sm:$0xff]
    %v208 = vld [vmem:[#allocation6 + $0x10] sm:$0xff]
    %v209 = vld [vmem:[#allocation6 + $0x18] sm:$0xff]
    %v210 = vld [vmem:[#allocation6 + $0x20] sm:$0xff]
    %v211 = vld [vmem:[#allocation6 + $0x28] sm:$0xff]
    %v212 = vld [vmem:[#allocation6 + $0x30] sm:$0xff]
    %v213 = vld [vmem:[#allocation6 + $0x38] sm:$0xff]
    %v214 = vld [vmem:[#allocation6 + $0x40] sm:$0xff]
    %v215 = vld [vmem:[#allocation6 + $0x48] sm:$0xff]
    %v216 = vld [vmem:[#allocation6 + $0x50] sm:$0xff]
    %v217 = vld [vmem:[#allocation6 + $0x58] sm:$0xff]
    %v218 = vld [vmem:[#allocation6 + $0x60] sm:$0xff]
    %v219 = vld [vmem:[#allocation6 + $0x68] sm:$0xff]
    %v220 = vld [vmem:[#allocation6 + $0x70] sm:$0xff]
    %v221 = vld [vmem:[#allocation6 + $0x78] sm:$0xff]
    %v222 = vld [vmem:[%s4] sm:$0x1]
    %v224 = vlaneseq
    %v225 = vshrl.u32 %v224, 7
    %v226 = vsub.s32 0, %v225
    %v227 = vrot.slane %v222, %v226
    %229 = vmatprep.subr.mxu0 0.0
    %230 = vmatpush1.msra.mxu0 %v206
    %231 = vmatprep.subr.mxu0 0.0
    %232 = vmatpush1.msra.mxu0 %v207
    %233 = vmatprep.subr.mxu0 0.0
    %234 = vmatpush1.msra.mxu0 %v208
    %235 = vmatprep.subr.mxu0 0.0
    %236 = vmatpush1.msra.mxu0 %v209
    %237 = vmatprep.subr.mxu0 0.0
    %238 = vmatpush1.msra.mxu0 %v210
    %239 = vmatprep.subr.mxu0 0.0
    %240 = vmatpush1.msra.mxu0 %v211
    %241 = vmatprep.subr.mxu0 0.0
    %242 = vmatpush1.msra.mxu0 %v212
    %243 = vmatprep.subr.mxu0 0.0
    %244 = vmatpush1.msra.mxu0 %v213
    %245 = vmatprep.subr.mxu0 0.0
    %246 = vmatpush1.msra.mxu0 %v214
    %247 = vmatprep.subr.mxu0 0.0
    %248 = vmatpush1.msra.mxu0 %v215
    %249 = vmatprep.subr.mxu0 0.0
    %250 = vmatpush1.msra.mxu0 %v216
    %251 = vmatprep.subr.mxu0 0.0
    %252 = vmatpush1.msra.mxu0 %v217
    %253 = vmatprep.subr.mxu0 0.0
    %254 = vmatpush1.msra.mxu0 %v218
    %255 = vmatprep.subr.mxu0 0.0
    %256 = vmatpush1.msra.mxu0 %v219
    %257 = vmatprep.subr.mxu0 0.0
    %258 = vmatpush1.msra.mxu0 %v220
    %259 = vmatprep.subr.mxu0 0.0
    %260 = vmatpush1.msra.mxu0 %v221
    %261 = vmatprep.subr.mxu0 0.0
    %262 = vmatpush1.msra.mxu0 0.0
    %263 = vmatprep.subr.mxu0 0.0
    %264 = vmatpush1.msra.mxu0 0.0
    %265 = vmatprep.subr.mxu0 0.0
    %266 = vmatpush1.msra.mxu0 0.0
    %267 = vmatprep.subr.mxu0 0.0
    %268 = vmatpush1.msra.mxu0 0.0
    %269 = vmatprep.subr.mxu0 0.0
    %270 = vmatpush1.msra.mxu0 0.0
    %271 = vmatprep.subr.mxu0 0.0
    %272 = vmatpush1.msra.mxu0 0.0
    %273 = vmatprep.subr.mxu0 0.0
    %274 = vmatpush1.msra.mxu0 0.0
    %275 = vmatprep.subr.mxu0 0.0
    %276 = vmatpush1.msra.mxu0 0.0
    %277 = vmatprep.subr.mxu0 0.0
    %278 = vmatpush1.msra.mxu0 0.0
    %279 = vmatprep.subr.mxu0 0.0
    %280 = vmatpush1.msra.mxu0 0.0
    %281 = vmatprep.subr.mxu0 0.0
    %282 = vmatpush1.msra.mxu0 0.0
    %283 = vmatprep.subr.mxu0 0.0
    %284 = vmatpush1.msra.mxu0 0.0
    %285 = vmatprep.subr.mxu0 0.0
    %286 = vmatpush1.msra.mxu0 0.0
    %287 = vmatprep.subr.mxu0 0.0
    %288 = vmatpush1.msra.mxu0 0.0
    %289 = vmatprep.subr.mxu0 0.0
    %290 = vmatpush1.msra.mxu0 0.0
    %291 = vmatprep.subr.mxu0 0.0
    %292 = vmatpush1.msra.mxu0 0.0
    %293 = vmatprep.mubr.f32.mxu0 0.0
    %294 = vmatmul.mubr.f32.gmra.mrb[0].mxu0 %v205
    %v295 = vpop.f32.mrb[0].mxu0
    %v296 = vadd.f32 %v227, %v295
    %v297 = vpop.f32.mrb[0].mxu0
    %298 = vdwg.mxu0
    %v299 = vld [vmem:[#allocation8] sm:$0xff]
    %v300 = vld [vmem:[#allocation8 + $0x8] sm:$0xff]
    %v301 = vld [vmem:[#allocation8 + $0x10] sm:$0xff]
    %v302 = vld [vmem:[#allocation8 + $0x18] sm:$0xff]
    %v303 = vld [vmem:[#allocation8 + $0x20] sm:$0xff]
    %v304 = vld [vmem:[#allocation8 + $0x28] sm:$0xff]
    %v305 = vld [vmem:[#allocation8 + $0x30] sm:$0xff]
    %v306 = vld [vmem:[#allocation8 + $0x38] sm:$0xff]
    %v307 = vld [vmem:[#allocation8 + $0x40] sm:$0xff]
    %v308 = vld [vmem:[#allocation8 + $0x48] sm:$0xff]
    %v309 = vld [vmem:[#allocation8 + $0x50] sm:$0xff]
    %v310 = vld [vmem:[#allocation8 + $0x58] sm:$0xff]
    %v311 = vld [vmem:[#allocation8 + $0x60] sm:$0xff]
    %v312 = vld [vmem:[#allocation8 + $0x68] sm:$0xff]
    %v313 = vld [vmem:[#allocation8 + $0x70] sm:$0xff]
    %v314 = vld [vmem:[#allocation8 + $0x78] sm:$0xff]
    %v315 = vld [vmem:[#allocation9] sm:$0xff]
    %v316 = vld [vmem:[#allocation9 + $0x8] sm:$0xff]
    %v317 = vld [vmem:[#allocation9 + $0x10] sm:$0xff]
    %v318 = vld [vmem:[#allocation9 + $0x18] sm:$0xff]
    %v319 = vld [vmem:[#allocation9 + $0x20] sm:$0xff]
    %v320 = vld [vmem:[#allocation9 + $0x28] sm:$0xff]
    %v321 = vld [vmem:[#allocation9 + $0x30] sm:$0xff]
    %v322 = vld [vmem:[#allocation9 + $0x38] sm:$0xff]
    %v323 = vld [vmem:[#allocation9 + $0x40] sm:$0xff]
    %v324 = vld [vmem:[#allocation9 + $0x48] sm:$0xff]
    %v325 = vld [vmem:[#allocation9 + $0x50] sm:$0xff]
    %v326 = vld [vmem:[#allocation9 + $0x58] sm:$0xff]
    %v327 = vld [vmem:[#allocation9 + $0x60] sm:$0xff]
    %v328 = vld [vmem:[#allocation9 + $0x68] sm:$0xff]
    %v329 = vld [vmem:[#allocation9 + $0x70] sm:$0xff]
    %v330 = vld [vmem:[#allocation9 + $0x78] sm:$0xff]
    %331 = vmatprep.subr.mxu0 0.0
    %332 = vmatpush1.msra.mxu0 %v315
    %333 = vmatprep.subr.mxu0 0.0
    %334 = vmatpush1.msra.mxu0 %v316
    %335 = vmatprep.subr.mxu0 0.0
    %336 = vmatpush1.msra.mxu0 %v317
    %337 = vmatprep.subr.mxu0 0.0
    %338 = vmatpush1.msra.mxu0 %v318
    %339 = vmatprep.subr.mxu0 0.0
    %340 = vmatpush1.msra.mxu0 %v319
    %341 = vmatprep.subr.mxu0 0.0
    %342 = vmatpush1.msra.mxu0 %v320
    %343 = vmatprep.subr.mxu0 0.0
    %344 = vmatpush1.msra.mxu0 %v321
    %345 = vmatprep.subr.mxu0 0.0
    %346 = vmatpush1.msra.mxu0 %v322
    %347 = vmatprep.subr.mxu0 0.0
    %348 = vmatpush1.msra.mxu0 %v323
    %349 = vmatprep.subr.mxu0 0.0
    %350 = vmatpush1.msra.mxu0 %v324
    %351 = vmatprep.subr.mxu0 0.0
    %352 = vmatpush1.msra.mxu0 %v325
    %353 = vmatprep.subr.mxu0 0.0
    %354 = vmatpush1.msra.mxu0 %v326
    %355 = vmatprep.subr.mxu0 0.0
    %356 = vmatpush1.msra.mxu0 %v327
    %357 = vmatprep.subr.mxu0 0.0
    %358 = vmatpush1.msra.mxu0 %v328
    %359 = vmatprep.subr.mxu0 0.0
    %360 = vmatpush1.msra.mxu0 %v329
    %361 = vmatprep.subr.mxu0 0.0
    %362 = vmatpush1.msra.mxu0 %v330
    %363 = vmatprep.subr.mxu0 0.0
    %364 = vmatpush1.msra.mxu0 0.0
    %365 = vmatprep.subr.mxu0 0.0
    %366 = vmatpush1.msra.mxu0 0.0
    %367 = vmatprep.subr.mxu0 0.0
    %368 = vmatpush1.msra.mxu0 0.0
    %369 = vmatprep.subr.mxu0 0.0
    %370 = vmatpush1.msra.mxu0 0.0
    %371 = vmatprep.subr.mxu0 0.0
    %372 = vmatpush1.msra.mxu0 0.0
    %373 = vmatprep.subr.mxu0 0.0
    %374 = vmatpush1.msra.mxu0 0.0
    %375 = vmatprep.subr.mxu0 0.0
    %376 = vmatpush1.msra.mxu0 0.0
    %377 = vmatprep.subr.mxu0 0.0
    %378 = vmatpush1.msra.mxu0 0.0
    %379 = vmatprep.subr.mxu0 0.0
    %380 = vmatpush1.msra.mxu0 0.0
    %381 = vmatprep.subr.mxu0 0.0
    %382 = vmatpush1.msra.mxu0 0.0
    %383 = vmatprep.subr.mxu0 0.0
    %384 = vmatpush1.msra.mxu0 0.0
    %385 = vmatprep.subr.mxu0 0.0
    %386 = vmatpush1.msra.mxu0 0.0
    %387 = vmatprep.subr.mxu0 0.0
    %388 = vmatpush1.msra.mxu0 0.0
    %389 = vmatprep.subr.mxu0 0.0
    %390 = vmatpush1.msra.mxu0 0.0
    %391 = vmatprep.subr.mxu0 0.0
    %392 = vmatpush1.msra.mxu0 0.0
    %393 = vmatprep.subr.mxu0 0.0
    %394 = vmatpush1.msra.mxu0 0.0
    %395 = vmatprep.mubr.f32.mxu0 0.0
    %396 = vmatmul.mubr.f32.gmra.mrb[0].mxu0 %v111
    %v397 = vpop.f32.mrb[0].mxu0
    %v398 = vadd.f32 0.0, %v397
    %v399 = vpop.f32.mrb[0].mxu0
    %400 = vdwg.mxu0
    %401 = vmatprep.subr.mxu0 0.0
    %402 = vmatpush1.msra.mxu0 %v299
    %403 = vmatprep.subr.mxu0 0.0
    %404 = vmatpush1.msra.mxu0 %v300
    %405 = vmatprep.subr.mxu0 0.0
    %406 = vmatpush1.msra.mxu0 %v301
    %407 = vmatprep.subr.mxu0 0.0
    %408 = vmatpush1.msra.mxu0 %v302
    %409 = vmatprep.subr.mxu0 0.0
    %410 = vmatpush1.msra.mxu0 %v303
    %411 = vmatprep.subr.mxu0 0.0
    %412 = vmatpush1.msra.mxu0 %v304
    %413 = vmatprep.subr.mxu0 0.0
    %414 = vmatpush1.msra.mxu0 %v305
    %415 = vmatprep.subr.mxu0 0.0
    %416 = vmatpush1.msra.mxu0 %v306
    %417 = vmatprep.subr.mxu0 0.0
    %418 = vmatpush1.msra.mxu0 %v307
    %419 = vmatprep.subr.mxu0 0.0
    %420 = vmatpush1.msra.mxu0 %v308
    %421 = vmatprep.subr.mxu0 0.0
    %422 = vmatpush1.msra.mxu0 %v309
    %423 = vmatprep.subr.mxu0 0.0
    %424 = vmatpush1.msra.mxu0 %v310
    %425 = vmatprep.subr.mxu0 0.0
    %426 = vmatpush1.msra.mxu0 %v311
    %427 = vmatprep.subr.mxu0 0.0
    %428 = vmatpush1.msra.mxu0 %v312
    %429 = vmatprep.subr.mxu0 0.0
    %430 = vmatpush1.msra.mxu0 %v313
    %431 = vmatprep.subr.mxu0 0.0
    %432 = vmatpush1.msra.mxu0 %v314
    %433 = vmatprep.subr.mxu0 0.0
    %434 = vmatpush1.msra.mxu0 0.0
    %435 = vmatprep.subr.mxu0 0.0
    %436 = vmatpush1.msra.mxu0 0.0
    %437 = vmatprep.subr.mxu0 0.0
    %438 = vmatpush1.msra.mxu0 0.0
    %439 = vmatprep.subr.mxu0 0.0
    %440 = vmatpush1.msra.mxu0 0.0
    %441 = vmatprep.subr.mxu0 0.0
    %442 = vmatpush1.msra.mxu0 0.0
    %443 = vmatprep.subr.mxu0 0.0
    %444 = vmatpush1.msra.mxu0 0.0
    %445 = vmatprep.subr.mxu0 0.0
    %446 = vmatpush1.msra.mxu0 0.0
    %447 = vmatprep.subr.mxu0 0.0
    %448 = vmatpush1.msra.mxu0 0.0
    %449 = vmatprep.subr.mxu0 0.0
    %450 = vmatpush1.msra.mxu0 0.0
    %451 = vmatprep.subr.mxu0 0.0
    %452 = vmatpush1.msra.mxu0 0.0
    %453 = vmatprep.subr.mxu0 0.0
    %454 = vmatpush1.msra.mxu0 0.0
    %455 = vmatprep.subr.mxu0 0.0
    %456 = vmatpush1.msra.mxu0 0.0
    %457 = vmatprep.subr.mxu0 0.0
    %458 = vmatpush1.msra.mxu0 0.0
    %459 = vmatprep.subr.mxu0 0.0
    %460 = vmatpush1.msra.mxu0 0.0
    %461 = vmatprep.subr.mxu0 0.0
    %462 = vmatpush1.msra.mxu0 0.0
    %463 = vmatprep.subr.mxu0 0.0
    %464 = vmatpush1.msra.mxu0 0.0
    %465 = vmatprep.mubr.f32.mxu0 0.0
    %466 = vmatmul.mubr.f32.gmra.mrb[0].mxu0 %v296
    %v467 = vpop.f32.mrb[0].mxu0
    %v468 = vadd.f32 %v398, %v467
    %v469 = vpop.f32.mrb[0].mxu0
    %470 = vdwg.mxu0
    %v471 = vld [vmem:[%s7] sm:$0x1]
    %v473 = vlaneseq
    %v474 = vshrl.u32 %v473, 7
    %v475 = vsub.s32 0, %v474
    %v476 = vrot.slane %v471, %v475
    %v478 = vadd.f32 %v468, %v476
    %v479 = vmax.f32 %v478, 0.0
    %v480 = vld [vmem:[#allocation11] sm:$0xff]
    %v481 = vld [vmem:[#allocation11 + $0x8] sm:$0xff]
    %v482 = vld [vmem:[#allocation11 + $0x10] sm:$0xff]
    %v483 = vld [vmem:[#allocation11 + $0x18] sm:$0xff]
    %v484 = vld [vmem:[#allocation11 + $0x20] sm:$0xff]
    %v485 = vld [vmem:[#allocation11 + $0x28] sm:$0xff]
    %v486 = vld [vmem:[#allocation11 + $0x30] sm:$0xff]
    %v487 = vld [vmem:[#allocation11 + $0x38] sm:$0xff]
    %v488 = vld [vmem:[#allocation11 + $0x40] sm:$0xff]
    %v489 = vld [vmem:[#allocation11 + $0x48] sm:$0xff]
    %v490 = vld [vmem:[#allocation11 + $0x50] sm:$0xff]
    %v491 = vld [vmem:[#allocation11 + $0x58] sm:$0xff]
    %v492 = vld [vmem:[#allocation11 + $0x60] sm:$0xff]
    %v493 = vld [vmem:[#allocation11 + $0x68] sm:$0xff]
    %v494 = vld [vmem:[#allocation11 + $0x70] sm:$0xff]
    %v495 = vld [vmem:[#allocation11 + $0x78] sm:$0xff]
    %v496 = vld [vmem:[%s9] sm:$0x1]
    %v498 = vlaneseq
    %v499 = vshrl.u32 %v498, 7
    %v500 = vsub.s32 0, %v499
    %v501 = vrot.slane %v496, %v500
    %503 = vmatprep.subr.mxu0 0.0
    %504 = vmatpush1.msra.mxu0 %v480
    %505 = vmatprep.subr.mxu0 0.0
    %506 = vmatpush1.msra.mxu0 %v481
    %507 = vmatprep.subr.mxu0 0.0
    %508 = vmatpush1.msra.mxu0 %v482
    %509 = vmatprep.subr.mxu0 0.0
    %510 = vmatpush1.msra.mxu0 %v483
    %511 = vmatprep.subr.mxu0 0.0
    %512 = vmatpush1.msra.mxu0 %v484
    %513 = vmatprep.subr.mxu0 0.0
    %514 = vmatpush1.msra.mxu0 %v485
    %515 = vmatprep.subr.mxu0 0.0
    %516 = vmatpush1.msra.mxu0 %v486
    %517 = vmatprep.subr.mxu0 0.0
    %518 = vmatpush1.msra.mxu0 %v487
    %519 = vmatprep.subr.mxu0 0.0
    %520 = vmatpush1.msra.mxu0 %v488
    %521 = vmatprep.subr.mxu0 0.0
    %522 = vmatpush1.msra.mxu0 %v489
    %523 = vmatprep.subr.mxu0 0.0
    %524 = vmatpush1.msra.mxu0 %v490
    %525 = vmatprep.subr.mxu0 0.0
    %526 = vmatpush1.msra.mxu0 %v491
    %527 = vmatprep.subr.mxu0 0.0
    %528 = vmatpush1.msra.mxu0 %v492
    %529 = vmatprep.subr.mxu0 0.0
    %530 = vmatpush1.msra.mxu0 %v493
    %531 = vmatprep.subr.mxu0 0.0
    %532 = vmatpush1.msra.mxu0 %v494
    %533 = vmatprep.subr.mxu0 0.0
    %534 = vmatpush1.msra.mxu0 %v495
    %535 = vmatprep.subr.mxu0 0.0
    %536 = vmatpush1.msra.mxu0 0.0
    %537 = vmatprep.subr.mxu0 0.0
    %538 = vmatpush1.msra.mxu0 0.0
    %539 = vmatprep.subr.mxu0 0.0
    %540 = vmatpush1.msra.mxu0 0.0
    %541 = vmatprep.subr.mxu0 0.0
    %542 = vmatpush1.msra.mxu0 0.0
    %543 = vmatprep.subr.mxu0 0.0
    %544 = vmatpush1.msra.mxu0 0.0
    %545 = vmatprep.subr.mxu0 0.0
    %546 = vmatpush1.msra.mxu0 0.0
    %547 = vmatprep.subr.mxu0 0.0
    %548 = vmatpush1.msra.mxu0 0.0
    %549 = vmatprep.subr.mxu0 0.0
    %550 = vmatpush1.msra.mxu0 0.0
    %551 = vmatprep.subr.mxu0 0.0
    %552 = vmatpush1.msra.mxu0 0.0
    %553 = vmatprep.subr.mxu0 0.0
    %554 = vmatpush1.msra.mxu0 0.0
    %555 = vmatprep.subr.mxu0 0.0
    %556 = vmatpush1.msra.mxu0 0.0
    %557 = vmatprep.subr.mxu0 0.0
    %558 = vmatpush1.msra.mxu0 0.0
    %559 = vmatprep.subr.mxu0 0.0
    %560 = vmatpush1.msra.mxu0 0.0
    %561 = vmatprep.subr.mxu0 0.0
    %562 = vmatpush1.msra.mxu0 0.0
    %563 = vmatprep.subr.mxu0 0.0
    %564 = vmatpush1.msra.mxu0 0.0
    %565 = vmatprep.subr.mxu0 0.0
    %566 = vmatpush1.msra.mxu0 0.0
    %567 = vmatprep.mubr.f32.mxu0 0.0
    %568 = vmatmul.mubr.f32.gmra.mrb[0].mxu0 %v479
    %v569 = vpop.f32.mrb[0].mxu0
    %v570 = vadd.f32 %v501, %v569
    %v571 = vpop.f32.mrb[0].mxu0
    %572 = vdwg.mxu0
    %vm573 = vcmask 130048
    %574 = vst.msk [vmem:[#allocation13] sm:$0xff] %vm573, %v296
    %575 = vst.msk [vmem:[#allocation12] sm:$0xff] %vm573, %v570
    // Predicated region
    $region62: #{conditioning_autoencoder_forward.1} parent=1 // pred_check
      _
    $region63: #{conditioning_autoencoder_forward.1} parent=1 // pred_check_branch
      %577 = sbr.rel (0) target = $region65
    $region64: #{conditioning_autoencoder_forward.1} parent=1 // pred_region
      %s579 = ssub.s32 128, 128
      %580 = vsyncadd [#allocation5], %s579
      %s582 = sshll.u32 [#allocation12], 4
      %s583 = int_to_ptr.vmem [resolvable:$true] %s582
      %585 = dma.vmem_to_hbm [thread:$0]  %s583, 128, %s10, [#allocation5]
    $region65: #{conditioning_autoencoder_forward.1} parent=1 // pred_fallthru
      _
    // Predicated region
    $region66: #{conditioning_autoencoder_forward.1} parent=1 // pred_check
      _
    $region67: #{conditioning_autoencoder_forward.1} parent=1 // pred_check_branch
      %587 = sbr.rel (0) target = $region69
    $region68: #{conditioning_autoencoder_forward.1} parent=1 // pred_region
      %s589 = ssub.s32 128, 128
      %590 = vsyncadd [#allocation14], %s589
      %s592 = sshll.u32 [#allocation13], 4
      %s593 = int_to_ptr.vmem [resolvable:$true] %s592
      %595 = dma.vmem_to_hbm [thread:$0]  %s593, 128, %s11, [#allocation14]
    $region69: #{conditioning_autoencoder_forward.1} parent=1 // pred_fallthru
      _
    // Predicated region
    $region70: #{conditioning_autoencoder_forward.1} parent=1 // pred_check
      _
    $region71: #{conditioning_autoencoder_forward.1} parent=1 // pred_check_branch
      %597 = sbr.rel (0) target = $region73
    $region72: #{conditioning_autoencoder_forward.1} parent=1 // pred_region
      %598 = dma.done [#allocation5], 128
    $region73: #{conditioning_autoencoder_forward.1} parent=1 // pred_fallthru
      _
    // Predicated region
    $region74: #{conditioning_autoencoder_forward.1} parent=1 // pred_check
      _
    $region75: #{conditioning_autoencoder_forward.1} parent=1 // pred_check_branch
      %600 = sbr.rel (0) target = $region77
    $region76: #{conditioning_autoencoder_forward.1} parent=1 // pred_region
      %601 = dma.done [#allocation14], 128
    $region77: #{conditioning_autoencoder_forward.1} parent=1 // pred_fallthru
      _
    %602 = vsyncpa [#allocation4], 1
    %603 = vsyncpa [#allocation7], 1
    %604 = vsyncpa [#allocation10], 1
    %605 = vsyncpa [#allocation5], 1
    %606 = vsyncpa [#allocation14], 1

</llo_original>
